<compile_context>
chip_gen: v7x
topology: tpu7x:2x2x1
jax: 0.10.0
libtpu: 0.0.40
codegen_flags: <defaults>
</compile_context>

<pallas_src>
import functools
import math

import numpy as np
import jax
import jax.numpy as jnp
from jax import lax
from jax.experimental import pallas as pl
from jax.experimental.pallas import tpu as pltpu

LANES = 128


def _round_up(a: int, b: int) -> int:
    return (a + b - 1) // b * b


def _pick_tile(rows: int, cap: int, min_blocks: int = 8) -> int:
    """Row tile: multiple of 8, <= cap, aiming for >= min_blocks grid steps."""
    cap = max(8, cap // 8 * 8)
    if rows <= 8:
        return 8
    return max(8, min(cap, _round_up(-(-rows // min_blocks), 8)))


def _exact_freq(k: int) -> np.float32:
    # Bit-identical to float32(torch.pi * 2**k): power-of-two scaling is exact in f32.
    return np.float32(np.pi * float(2 ** k))


# ----------------------------------------------------------------------------------
# Main path: 2*n_bases divides 128.  One trig per output element + MXU spread.
# ----------------------------------------------------------------------------------
def _pe_packed_kernel(x_ref, pmat_ref, out_ref, *, n_bases):
    """x_ref: (TR, P) f32 with P = 256 // (2*n_bases) input elements per super-row.
    pmat_ref: (512, 256) f32 constant 0/1 spread matrix (two ones per column: hi + lo).
    out_ref: (TR, 256) f32, already in final PyTorch-contiguous channel-last order.
    """
    F = n_bases
    P = x_ref.shape[1]                      # = 256 // (2F)
    shift_f = max(F.bit_length() - 1, 0)    # log2(F); F is a power of two on this path

    # Argument-lane layout: lane j <-> (element j // F, basis j % F); all 128 lanes
    # hold *distinct* arguments, so each trig call below produces 128 useful results.
    lane = lax.broadcasted_iota(jnp.int32, (1, LANES), 1)
    grp = jnp.right_shift(lane, shift_f)    # j // F in [0, P)
    kk = jnp.bitwise_and(lane, F - 1)       # j %  F

    # Per-lane frequency pi * 2**(j % F) from exact f32 constants ((1,128)-sized setup).
    freq = jnp.where(kk == 0, _exact_freq(0), jnp.float32(0.0))
    for b in range(1, F):
        freq = jnp.where(kk == b, _exact_freq(b), freq)

    # Replicate each input element across its F argument lanes (bit-exact copies).
    x = x_ref[...]                          # (TR, P)
    x_rep = jnp.where(grp == 0, x[:, 0:1], jnp.float32(0.0))
    for g in range(1, P):
        x_rep = jnp.where(grp == g, x[:, g:g + 1], x_rep)

    # Same single correctly-rounded f32 multiply as the reference -> identical trig
    # arguments, hence bit-identical cos/sin values.
    xs = x_rep * freq                       # (TR, 128)
    cos_v = jnp.cos(xs)                     # one trig evaluation per output element
    sin_v = jnp.sin(xs)

    # Exact hi/lo split: hi is representable in bf16, lo is <= 2^-9 of the value, so
    # the 0/1 spread matmul below is (near-)exact even under bf16 MXU passes.
    def _split(v):
        hi = v.astype(jnp.bfloat16).astype(jnp.float32)
        return hi, v - hi

    c_hi, c_lo = _split(cos_v)
    s_hi, s_lo = _split(sin_v)
    cs = jnp.concatenate([c_hi, s_hi, c_lo, s_lo], axis=1)           # (TR, 512)

    # Place values into the interleaved [cos F | sin F] output order on the idle MXU.
    out_ref[...] = jnp.dot(cs, pmat_ref[...], preferred_element_type=jnp.float32)


def _spread_matrix(n_bases: int) -> np.ndarray:
    """(512, 256) 0/1 matrix: out[:, L] = cs_hi[:, src(L)] + cs_lo[:, src(L)]."""
    F, C = n_bases, 2 * n_bases
    L = np.arange(256)
    e, c = L // C, L % C
    src = np.where(c < F, e * F + c, 128 + e * F + (c - F))
    p = np.zeros((512, 256), np.float32)
    p[src, L] = 1.0          # hi halves live in cs[:, 0:256]
    p[src + 256, L] = 1.0    # lo halves live in cs[:, 256:512]
    return p


def _pe_packed(x_flat, orig_shape, n_bases):
    C = 2 * n_bases
    P = 256 // C                             # input elements per 256-lane super-row
    M = x_flat.shape[0]
    R = -(-M // P)                           # super-rows needed
    TR = _pick_tile(R, cap=512)              # <=512 KiB output block, ~8+ grid steps
    R_pad = _round_up(R, TR)
    M_pad = R_pad * P

    if M_pad != M:
        x_flat = jnp.pad(x_flat, (0, M_pad - M))
    x2 = x_flat.reshape(R_pad, P)
    pmat = jnp.asarray(_spread_matrix(n_bases))

    out2 = pl.pallas_call(
        functools.partial(_pe_packed_kernel, n_bases=n_bases),
        out_shape=jax.ShapeDtypeStruct((R_pad, 2 * LANES), jnp.float32),
        grid_spec=pltpu.PrefetchScalarGridSpec(
            num_scalar_prefetch=0,
            grid=(R_pad // TR,),
            in_specs=[pl.BlockSpec((TR, P), lambda i: (i, 0)),
                      pl.BlockSpec((512, 256), lambda i: (0, 0))],
            out_specs=pl.BlockSpec((TR, 2 * LANES), lambda i: (i, 0)),
        ),
        compiler_params=pltpu.CompilerParams(
            dimension_semantics=("parallel",),
        ),
        cost_estimate=pl.CostEstimate(
            flops=M_pad * C + 2 * R_pad * 512 * 256,
            transcendentals=M_pad * C,
            bytes_accessed=M_pad * 4 + 512 * 256 * 4 + M_pad * C * 4,
        ),
    )(x2, pmat)

    flat = out2.reshape(-1)                  # already final memory order -> free reshape
    if M_pad != M:
        flat = flat[: M * C]
    return flat.reshape(*orig_shape, C)


# ----------------------------------------------------------------------------------
# General path: arbitrary n_bases.  Super-rows of lcm(2F, 128) lanes, PyTorch order,
# dense lane-wide stores, no wrapper transpose.
# ----------------------------------------------------------------------------------
def _pe_general_kernel(x_ref, out_ref, *, n_bases):
    """x_ref: (TR, P) f32; out_ref: (TR, W) f32 with W = P * 2*n_bases (final order)."""
    F = n_bases
    C = 2 * F
    P = x_ref.shape[1]
    W = out_ref.shape[1]

    lane = lax.broadcasted_iota(jnp.int32, (1, W), 1)
    # e = lane // C and c = lane % C built from running compares (no VPU integer div).
    e = jnp.zeros_like(lane)
    for g in range(1, P):
        e = e + (lane >= g * C).astype(jnp.int32)
    c = lane - e * C
    is_sin = c >= F
    k = jnp.where(is_sin, c - F, c)
    freq = jnp.where(k == 0, _exact_freq(0), jnp.float32(0.0))
    for b in range(1, F):
        freq = jnp.where(k == b, _exact_freq(b), freq)

    x = x_ref[...]
    x_rep = jnp.where(e == 0, x[:, 0:1], jnp.float32(0.0))
    for g in range(1, P):
        x_rep = jnp.where(e == g, x[:, g:g + 1], x_rep)

    xs = x_rep * freq
    # TODO(synk): this path still evaluates both trig functions per lane; an exact
    # single-trig spread needs a W-wide permutation which is only cheap for W == 256.
    out_ref[...] = jnp.where(is_sin, jnp.sin(xs), jnp.cos(xs))


def _pe_general(x_flat, orig_shape, n_bases):
    C = 2 * n_bases
    W = (C * LANES) // math.gcd(C, LANES)    # lcm(C, 128): super-row width in lanes
    P = W // C                               # input elements per super-row
    M = x_flat.shape[0]
    R = -(-M // P)
    cap = max(8, (512 * 1024) // (W * 4))    # keep the (TR, W) output block <= ~512 KiB
    TR = _pick_tile(R, cap=cap)
    R_pad = _round_up(R, TR)
    M_pad = R_pad * P

    if M_pad != M:
        x_flat = jnp.pad(x_flat, (0, M_pad - M))
    x2 = x_flat.reshape(R_pad, P)

    out2 = pl.pallas_call(
        functools.partial(_pe_general_kernel, n_bases=n_bases),
        out_shape=jax.ShapeDtypeStruct((R_pad, W), jnp.float32),
        grid_spec=pltpu.PrefetchScalarGridSpec(
            num_scalar_prefetch=0,
            grid=(R_pad // TR,),
            in_specs=[pl.BlockSpec((TR, P), lambda i: (i, 0))],
            out_specs=pl.BlockSpec((TR, W), lambda i: (i, 0)),
        ),
        compiler_params=pltpu.CompilerParams(
            dimension_semantics=("parallel",),
        ),
        cost_estimate=pl.CostEstimate(
            flops=2 * M_pad * C,
            transcendentals=2 * M_pad * C,
            bytes_accessed=M_pad * 4 + M_pad * C * 4,
        ),
    )(x2)

    flat = out2.reshape(-1)                  # already final memory order
    if M_pad != M:
        flat = flat[: M * C]
    return flat.reshape(*orig_shape, C)


def positional_encoding_1d(x: jax.Array, n_bases: int) -> jax.Array:
    """Fourier positional encoding, matching PositionalEncoding1d.forward."""
    C = 2 * n_bases
    orig_shape = x.shape
    x_flat = x.reshape(-1).astype(jnp.float32)
    if C <= LANES and LANES % C == 0:
        return _pe_packed(x_flat, orig_shape, n_bases)
    return _pe_general(x_flat, orig_shape, n_bases)


if __name__ == "__main__":
    def reference(x, n_bases):
        freq = jnp.asarray(np.pi * (2.0 ** np.arange(n_bases, dtype=np.float64)),
                           dtype=jnp.float32)
        xs = x[..., None] * freq
        return jnp.concatenate([jnp.cos(xs), jnp.sin(xs)], axis=-1)

    key = jax.random.PRNGKey(0)

    # Main (packed) path: 2*n_bases divides 128.
    n_bases = 8
    x = jax.random.normal(key, (2, 4, 16, 16), dtype=jnp.float32)
    out = jax.block_until_ready(positional_encoding_1d(x, n_bases))
    assert out.shape == (2, 4, 16, 16, 2 * n_bases), out.shape
    assert out.dtype == jnp.float32
    assert jnp.allclose(out, reference(x, n_bases), atol=2e-5, rtol=2e-5)

    # Ragged element count exercising the padding / tail-slice logic.
    x_b = jax.random.normal(jax.random.PRNGKey(1), (3, 5, 7), dtype=jnp.float32)
    out_b = jax.block_until_ready(positional_encoding_1d(x_b, n_bases))
    assert out_b.shape == (3, 5, 7, 2 * n_bases), out_b.shape
    assert jnp.allclose(out_b, reference(x_b, n_bases), atol=2e-5, rtol=2e-5)

    # General path: 2*n_bases does not divide 128 (super-row width lcm(2F,128)=640).
    n_bases_c = 5
    x_c = jax.random.normal(jax.random.PRNGKey(2), (2, 3, 7, 5), dtype=jnp.float32)
    out_c = jax.block_until_ready(positional_encoding_1d(x_c, n_bases_c))
    assert out_c.shape == (2, 3, 7, 5, 2 * n_bases_c), out_c.shape
    assert jnp.allclose(out_c, reference(x_c, n_bases_c), atol=2e-5, rtol=2e-5)

    print("KERNEL_OK")
</pallas_src>

<mosaic_0001>
module attributes {stable_mosaic.version = 11 : i64} {
  func.func @_pe_packed_kernel(%arg0: i32, %arg1: memref<16x16xf32, #tpu.memory_space<vmem>>, %arg2: memref<512x256xf32, #tpu.memory_space<vmem>>, %arg3: memref<16x256xf32, #tpu.memory_space<vmem>>) attributes {dimension_semantics = [#tpu.dimension_semantics<parallel>], iteration_bounds = array<i64: 8>, scalar_prefetch = 0 : i64, scratch_operands = 0 : i64, tpu.core_type = #tpu.core_type<tc>, window_params = [{transform_indices = @transform_0, window_bounds = array<i64: 16, 16>}, {pipeline_mode = #tpu.pipeline_mode<synchronous>, transform_indices = @transform_1, window_bounds = array<i64: 512, 256>}, {transform_indices = @transform_2, window_bounds = array<i64: 16, 256>}]} {
    %0 = tpu.iota {dimensions = array<i32: 1>} : vector<1x128xi32>
    %c3_i32 = arith.constant 3 : i32
    %1 = vector.broadcast %c3_i32 : i32 to vector<1x128xi32>
    %2 = arith.shrsi %0, %1 : vector<1x128xi32>
    %c7_i32 = arith.constant 7 : i32
    %3 = vector.broadcast %c7_i32 : i32 to vector<1x128xi32>
    %4 = arith.andi %0, %3 : vector<1x128xi32>
    %c0_i32 = arith.constant 0 : i32
    %5 = vector.broadcast %c0_i32 : i32 to vector<1x128xi32>
    %6 = arith.cmpi eq, %4, %5 : vector<1x128xi32>
    %cst = arith.constant 3.14159274 : f32
    %cst_0 = arith.constant 0.000000e+00 : f32
    %7 = vector.broadcast %cst : f32 to vector<1x128xf32>
    %8 = vector.broadcast %cst_0 : f32 to vector<1x128xf32>
    %9 = arith.select %6, %7, %8 : vector<1x128xi1>, vector<1x128xf32>
    %c1_i32 = arith.constant 1 : i32
    %10 = vector.broadcast %c1_i32 : i32 to vector<1x128xi32>
    %11 = arith.cmpi eq, %4, %10 : vector<1x128xi32>
    %cst_1 = arith.constant 6.28318548 : f32
    %12 = vector.broadcast %cst_1 : f32 to vector<1x128xf32>
    %13 = arith.select %11, %12, %9 : vector<1x128xi1>, vector<1x128xf32>
    %c2_i32 = arith.constant 2 : i32
    %14 = vector.broadcast %c2_i32 : i32 to vector<1x128xi32>
    %15 = arith.cmpi eq, %4, %14 : vector<1x128xi32>
    %cst_2 = arith.constant 12.566371 : f32
    %16 = vector.broadcast %cst_2 : f32 to vector<1x128xf32>
    %17 = arith.select %15, %16, %13 : vector<1x128xi1>, vector<1x128xf32>
    %c3_i32_3 = arith.constant 3 : i32
    %18 = vector.broadcast %c3_i32_3 : i32 to vector<1x128xi32>
    %19 = arith.cmpi eq, %4, %18 : vector<1x128xi32>
    %cst_4 = arith.constant 25.1327419 : f32
    %20 = vector.broadcast %cst_4 : f32 to vector<1x128xf32>
    %21 = arith.select %19, %20, %17 : vector<1x128xi1>, vector<1x128xf32>
    %c4_i32 = arith.constant 4 : i32
    %22 = vector.broadcast %c4_i32 : i32 to vector<1x128xi32>
    %23 = arith.cmpi eq, %4, %22 : vector<1x128xi32>
    %cst_5 = arith.constant 50.2654839 : f32
    %24 = vector.broadcast %cst_5 : f32 to vector<1x128xf32>
    %25 = arith.select %23, %24, %21 : vector<1x128xi1>, vector<1x128xf32>
    %c5_i32 = arith.constant 5 : i32
    %26 = vector.broadcast %c5_i32 : i32 to vector<1x128xi32>
    %27 = arith.cmpi eq, %4, %26 : vector<1x128xi32>
    %cst_6 = arith.constant 100.530968 : f32
    %28 = vector.broadcast %cst_6 : f32 to vector<1x128xf32>
    %29 = arith.select %27, %28, %25 : vector<1x128xi1>, vector<1x128xf32>
    %c6_i32 = arith.constant 6 : i32
    %30 = vector.broadcast %c6_i32 : i32 to vector<1x128xi32>
    %31 = arith.cmpi eq, %4, %30 : vector<1x128xi32>
    %cst_7 = arith.constant 201.061935 : f32
    %32 = vector.broadcast %cst_7 : f32 to vector<1x128xf32>
    %33 = arith.select %31, %32, %29 : vector<1x128xi1>, vector<1x128xf32>
    %c7_i32_8 = arith.constant 7 : i32
    %34 = vector.broadcast %c7_i32_8 : i32 to vector<1x128xi32>
    %35 = arith.cmpi eq, %4, %34 : vector<1x128xi32>
    %cst_9 = arith.constant 402.123871 : f32
    %36 = vector.broadcast %cst_9 : f32 to vector<1x128xf32>
    %37 = arith.select %35, %36, %33 : vector<1x128xi1>, vector<1x128xf32>
    %c0 = arith.constant 0 : index
    %c0_10 = arith.constant 0 : index
    %38 = vector.load %arg1[%c0, %c0_10] : memref<16x16xf32, #tpu.memory_space<vmem>>, vector<16x16xf32>
    %c0_i32_11 = arith.constant 0 : i32
    %39 = vector.broadcast %c0_i32_11 : i32 to vector<1x128xi32>
    %40 = arith.cmpi eq, %2, %39 : vector<1x128xi32>
    %41 = vector.extract_strided_slice %38 {offsets = [0, 0], sizes = [16, 1], strides = [1, 1]} : vector<16x16xf32> to vector<16x1xf32>
    %cst_12 = arith.constant 0.000000e+00 : f32
    %42 = vector.shape_cast %40 : vector<1x128xi1> to vector<1x128xi1>
    %43 = vector.broadcast %42 : vector<1x128xi1> to vector<16x128xi1>
    %44 = vector.shape_cast %41 : vector<16x1xf32> to vector<16x1xf32>
    %45 = vector.broadcast %44 : vector<16x1xf32> to vector<16x128xf32>
    %46 = vector.broadcast %cst_12 : f32 to vector<16x128xf32>
    %47 = arith.select %43, %45, %46 : vector<16x128xi1>, vector<16x128xf32>
    %c1_i32_13 = arith.constant 1 : i32
    %48 = vector.broadcast %c1_i32_13 : i32 to vector<1x128xi32>
    %49 = arith.cmpi eq, %2, %48 : vector<1x128xi32>
    %50 = vector.extract_strided_slice %38 {offsets = [0, 1], sizes = [16, 1], strides = [1, 1]} : vector<16x16xf32> to vector<16x1xf32>
    %51 = vector.shape_cast %49 : vector<1x128xi1> to vector<1x128xi1>
    %52 = vector.broadcast %51 : vector<1x128xi1> to vector<16x128xi1>
    %53 = vector.shape_cast %50 : vector<16x1xf32> to vector<16x1xf32>
    %54 = vector.broadcast %53 : vector<16x1xf32> to vector<16x128xf32>
    %55 = arith.select %52, %54, %47 : vector<16x128xi1>, vector<16x128xf32>
    %c2_i32_14 = arith.constant 2 : i32
    %56 = vector.broadcast %c2_i32_14 : i32 to vector<1x128xi32>
    %57 = arith.cmpi eq, %2, %56 : vector<1x128xi32>
    %58 = vector.extract_strided_slice %38 {offsets = [0, 2], sizes = [16, 1], strides = [1, 1]} : vector<16x16xf32> to vector<16x1xf32>
    %59 = vector.shape_cast %57 : vector<1x128xi1> to vector<1x128xi1>
    %60 = vector.broadcast %59 : vector<1x128xi1> to vector<16x128xi1>
    %61 = vector.shape_cast %58 : vector<16x1xf32> to vector<16x1xf32>
    %62 = vector.broadcast %61 : vector<16x1xf32> to vector<16x128xf32>
    %63 = arith.select %60, %62, %55 : vector<16x128xi1>, vector<16x128xf32>
    %c3_i32_15 = arith.constant 3 : i32
    %64 = vector.broadcast %c3_i32_15 : i32 to vector<1x128xi32>
    %65 = arith.cmpi eq, %2, %64 : vector<1x128xi32>
    %66 = vector.extract_strided_slice %38 {offsets = [0, 3], sizes = [16, 1], strides = [1, 1]} : vector<16x16xf32> to vector<16x1xf32>
    %67 = vector.shape_cast %65 : vector<1x128xi1> to vector<1x128xi1>
    %68 = vector.broadcast %67 : vector<1x128xi1> to vector<16x128xi1>
    %69 = vector.shape_cast %66 : vector<16x1xf32> to vector<16x1xf32>
    %70 = vector.broadcast %69 : vector<16x1xf32> to vector<16x128xf32>
    %71 = arith.select %68, %70, %63 : vector<16x128xi1>, vector<16x128xf32>
    %c4_i32_16 = arith.constant 4 : i32
    %72 = vector.broadcast %c4_i32_16 : i32 to vector<1x128xi32>
    %73 = arith.cmpi eq, %2, %72 : vector<1x128xi32>
    %74 = vector.extract_strided_slice %38 {offsets = [0, 4], sizes = [16, 1], strides = [1, 1]} : vector<16x16xf32> to vector<16x1xf32>
    %75 = vector.shape_cast %73 : vector<1x128xi1> to vector<1x128xi1>
    %76 = vector.broadcast %75 : vector<1x128xi1> to vector<16x128xi1>
    %77 = vector.shape_cast %74 : vector<16x1xf32> to vector<16x1xf32>
    %78 = vector.broadcast %77 : vector<16x1xf32> to vector<16x128xf32>
    %79 = arith.select %76, %78, %71 : vector<16x128xi1>, vector<16x128xf32>
    %c5_i32_17 = arith.constant 5 : i32
    %80 = vector.broadcast %c5_i32_17 : i32 to vector<1x128xi32>
    %81 = arith.cmpi eq, %2, %80 : vector<1x128xi32>
    %82 = vector.extract_strided_slice %38 {offsets = [0, 5], sizes = [16, 1], strides = [1, 1]} : vector<16x16xf32> to vector<16x1xf32>
    %83 = vector.shape_cast %81 : vector<1x128xi1> to vector<1x128xi1>
    %84 = vector.broadcast %83 : vector<1x128xi1> to vector<16x128xi1>
    %85 = vector.shape_cast %82 : vector<16x1xf32> to vector<16x1xf32>
    %86 = vector.broadcast %85 : vector<16x1xf32> to vector<16x128xf32>
    %87 = arith.select %84, %86, %79 : vector<16x128xi1>, vector<16x128xf32>
    %c6_i32_18 = arith.constant 6 : i32
    %88 = vector.broadcast %c6_i32_18 : i32 to vector<1x128xi32>
    %89 = arith.cmpi eq, %2, %88 : vector<1x128xi32>
    %90 = vector.extract_strided_slice %38 {offsets = [0, 6], sizes = [16, 1], strides = [1, 1]} : vector<16x16xf32> to vector<16x1xf32>
    %91 = vector.shape_cast %89 : vector<1x128xi1> to vector<1x128xi1>
    %92 = vector.broadcast %91 : vector<1x128xi1> to vector<16x128xi1>
    %93 = vector.shape_cast %90 : vector<16x1xf32> to vector<16x1xf32>
    %94 = vector.broadcast %93 : vector<16x1xf32> to vector<16x128xf32>
    %95 = arith.select %92, %94, %87 : vector<16x128xi1>, vector<16x128xf32>
    %c7_i32_19 = arith.constant 7 : i32
    %96 = vector.broadcast %c7_i32_19 : i32 to vector<1x128xi32>
    %97 = arith.cmpi eq, %2, %96 : vector<1x128xi32>
    %98 = vector.extract_strided_slice %38 {offsets = [0, 7], sizes = [16, 1], strides = [1, 1]} : vector<16x16xf32> to vector<16x1xf32>
    %99 = vector.shape_cast %97 : vector<1x128xi1> to vector<1x128xi1>
    %100 = vector.broadcast %99 : vector<1x128xi1> to vector<16x128xi1>
    %101 = vector.shape_cast %98 : vector<16x1xf32> to vector<16x1xf32>
    %102 = vector.broadcast %101 : vector<16x1xf32> to vector<16x128xf32>
    %103 = arith.select %100, %102, %95 : vector<16x128xi1>, vector<16x128xf32>
    %c8_i32 = arith.constant 8 : i32
    %104 = vector.broadcast %c8_i32 : i32 to vector<1x128xi32>
    %105 = arith.cmpi eq, %2, %104 : vector<1x128xi32>
    %106 = vector.extract_strided_slice %38 {offsets = [0, 8], sizes = [16, 1], strides = [1, 1]} : vector<16x16xf32> to vector<16x1xf32>
    %107 = vector.shape_cast %105 : vector<1x128xi1> to vector<1x128xi1>
    %108 = vector.broadcast %107 : vector<1x128xi1> to vector<16x128xi1>
    %109 = vector.shape_cast %106 : vector<16x1xf32> to vector<16x1xf32>
    %110 = vector.broadcast %109 : vector<16x1xf32> to vector<16x128xf32>
    %111 = arith.select %108, %110, %103 : vector<16x128xi1>, vector<16x128xf32>
    %c9_i32 = arith.constant 9 : i32
    %112 = vector.broadcast %c9_i32 : i32 to vector<1x128xi32>
    %113 = arith.cmpi eq, %2, %112 : vector<1x128xi32>
    %114 = vector.extract_strided_slice %38 {offsets = [0, 9], sizes = [16, 1], strides = [1, 1]} : vector<16x16xf32> to vector<16x1xf32>
    %115 = vector.shape_cast %113 : vector<1x128xi1> to vector<1x128xi1>
    %116 = vector.broadcast %115 : vector<1x128xi1> to vector<16x128xi1>
    %117 = vector.shape_cast %114 : vector<16x1xf32> to vector<16x1xf32>
    %118 = vector.broadcast %117 : vector<16x1xf32> to vector<16x128xf32>
    %119 = arith.select %116, %118, %111 : vector<16x128xi1>, vector<16x128xf32>
    %c10_i32 = arith.constant 10 : i32
    %120 = vector.broadcast %c10_i32 : i32 to vector<1x128xi32>
    %121 = arith.cmpi eq, %2, %120 : vector<1x128xi32>
    %122 = vector.extract_strided_slice %38 {offsets = [0, 10], sizes = [16, 1], strides = [1, 1]} : vector<16x16xf32> to vector<16x1xf32>
    %123 = vector.shape_cast %121 : vector<1x128xi1> to vector<1x128xi1>
    %124 = vector.broadcast %123 : vector<1x128xi1> to vector<16x128xi1>
    %125 = vector.shape_cast %122 : vector<16x1xf32> to vector<16x1xf32>
    %126 = vector.broadcast %125 : vector<16x1xf32> to vector<16x128xf32>
    %127 = arith.select %124, %126, %119 : vector<16x128xi1>, vector<16x128xf32>
    %c11_i32 = arith.constant 11 : i32
    %128 = vector.broadcast %c11_i32 : i32 to vector<1x128xi32>
    %129 = arith.cmpi eq, %2, %128 : vector<1x128xi32>
    %130 = vector.extract_strided_slice %38 {offsets = [0, 11], sizes = [16, 1], strides = [1, 1]} : vector<16x16xf32> to vector<16x1xf32>
    %131 = vector.shape_cast %129 : vector<1x128xi1> to vector<1x128xi1>
    %132 = vector.broadcast %131 : vector<1x128xi1> to vector<16x128xi1>
    %133 = vector.shape_cast %130 : vector<16x1xf32> to vector<16x1xf32>
    %134 = vector.broadcast %133 : vector<16x1xf32> to vector<16x128xf32>
    %135 = arith.select %132, %134, %127 : vector<16x128xi1>, vector<16x128xf32>
    %c12_i32 = arith.constant 12 : i32
    %136 = vector.broadcast %c12_i32 : i32 to vector<1x128xi32>
    %137 = arith.cmpi eq, %2, %136 : vector<1x128xi32>
    %138 = vector.extract_strided_slice %38 {offsets = [0, 12], sizes = [16, 1], strides = [1, 1]} : vector<16x16xf32> to vector<16x1xf32>
    %139 = vector.shape_cast %137 : vector<1x128xi1> to vector<1x128xi1>
    %140 = vector.broadcast %139 : vector<1x128xi1> to vector<16x128xi1>
    %141 = vector.shape_cast %138 : vector<16x1xf32> to vector<16x1xf32>
    %142 = vector.broadcast %141 : vector<16x1xf32> to vector<16x128xf32>
    %143 = arith.select %140, %142, %135 : vector<16x128xi1>, vector<16x128xf32>
    %c13_i32 = arith.constant 13 : i32
    %144 = vector.broadcast %c13_i32 : i32 to vector<1x128xi32>
    %145 = arith.cmpi eq, %2, %144 : vector<1x128xi32>
    %146 = vector.extract_strided_slice %38 {offsets = [0, 13], sizes = [16, 1], strides = [1, 1]} : vector<16x16xf32> to vector<16x1xf32>
    %147 = vector.shape_cast %145 : vector<1x128xi1> to vector<1x128xi1>
    %148 = vector.broadcast %147 : vector<1x128xi1> to vector<16x128xi1>
    %149 = vector.shape_cast %146 : vector<16x1xf32> to vector<16x1xf32>
    %150 = vector.broadcast %149 : vector<16x1xf32> to vector<16x128xf32>
    %151 = arith.select %148, %150, %143 : vector<16x128xi1>, vector<16x128xf32>
    %c14_i32 = arith.constant 14 : i32
    %152 = vector.broadcast %c14_i32 : i32 to vector<1x128xi32>
    %153 = arith.cmpi eq, %2, %152 : vector<1x128xi32>
    %154 = vector.extract_strided_slice %38 {offsets = [0, 14], sizes = [16, 1], strides = [1, 1]} : vector<16x16xf32> to vector<16x1xf32>
    %155 = vector.shape_cast %153 : vector<1x128xi1> to vector<1x128xi1>
    %156 = vector.broadcast %155 : vector<1x128xi1> to vector<16x128xi1>
    %157 = vector.shape_cast %154 : vector<16x1xf32> to vector<16x1xf32>
    %158 = vector.broadcast %157 : vector<16x1xf32> to vector<16x128xf32>
    %159 = arith.select %156, %158, %151 : vector<16x128xi1>, vector<16x128xf32>
    %c15_i32 = arith.constant 15 : i32
    %160 = vector.broadcast %c15_i32 : i32 to vector<1x128xi32>
    %161 = arith.cmpi eq, %2, %160 : vector<1x128xi32>
    %162 = vector.extract_strided_slice %38 {offsets = [0, 15], sizes = [16, 1], strides = [1, 1]} : vector<16x16xf32> to vector<16x1xf32>
    %163 = vector.shape_cast %161 : vector<1x128xi1> to vector<1x128xi1>
    %164 = vector.broadcast %163 : vector<1x128xi1> to vector<16x128xi1>
    %165 = vector.shape_cast %162 : vector<16x1xf32> to vector<16x1xf32>
    %166 = vector.broadcast %165 : vector<16x1xf32> to vector<16x128xf32>
    %167 = arith.select %164, %166, %159 : vector<16x128xi1>, vector<16x128xf32>
    %168 = vector.broadcast %37 : vector<1x128xf32> to vector<16x128xf32>
    %169 = arith.mulf %167, %168 : vector<16x128xf32>
    %170 = math.cos %169 : vector<16x128xf32>
    %171 = math.sin %169 : vector<16x128xf32>
    %172 = arith.truncf %170 : vector<16x128xf32> to vector<16x128xbf16>
    %173 = arith.extf %172 : vector<16x128xbf16> to vector<16x128xf32>
    %174 = arith.subf %170, %173 : vector<16x128xf32>
    %175 = arith.truncf %171 : vector<16x128xf32> to vector<16x128xbf16>
    %176 = arith.extf %175 : vector<16x128xbf16> to vector<16x128xf32>
    %177 = arith.subf %171, %176 : vector<16x128xf32>
    %178 = tpu.concatenate %173, %176, %174, %177 in 1 : vector<16x128xf32>, vector<16x128xf32>, vector<16x128xf32>, vector<16x128xf32> -> vector<16x512xf32>
    %c0_20 = arith.constant 0 : index
    %c0_21 = arith.constant 0 : index
    %179 = vector.load %arg2[%c0_20, %c0_21] : memref<512x256xf32, #tpu.memory_space<vmem>>, vector<512x256xf32>
    %cst_22 = arith.constant dense<0.000000e+00> : vector<16x256xf32>
    %180 = tpu.matmul %178, %179, %cst_22 {dimension_numbers = #tpu.dot_dimension_numbers<[1], [0], [0], [1], [0, 0, 1, 1], [], []>} : vector<16x512xf32>, vector<512x256xf32>, vector<16x256xf32> -> vector<16x256xf32>
    %c0_23 = arith.constant 0 : index
    %c0_24 = arith.constant 0 : index
    %181 = vector.load %arg3[%c0_23, %c0_24] : memref<16x256xf32, #tpu.memory_space<vmem>>, vector<16x256xf32>
    tpu.vector_store %arg3[%c0_23, %c0_24], %180 {strides = array<i32>} : memref<16x256xf32, #tpu.memory_space<vmem>>, vector<16x256xf32>,
    return
  }
  func.func @transform_0(%arg0: i32) -> (i32, i32) {
    %c0_i32 = arith.constant 0 : i32
    %c0_i32_0 = arith.constant 0 : i32
    return %arg0, %c0_i32 : i32, i32
  }
  func.func @transform_1(%arg0: i32) -> (i32, i32) {
    %c0_i32 = arith.constant 0 : i32
    %c0_i32_0 = arith.constant 0 : i32
    %c0_i32_1 = arith.constant 0 : i32
    return %c0_i32, %c0_i32_0 : i32, i32
  }
  func.func @transform_2(%arg0: i32) -> (i32, i32) {
    %c0_i32 = arith.constant 0 : i32
    %c0_i32_0 = arith.constant 0 : i32
    return %arg0, %c0_i32 : i32, i32
  }
}

</mosaic_0001>

<llo_original>
// kernel: tpu_custom_call.1
$region0: #{tpu_custom_call.1}
  #allocation0 [shape = 'u32[]', space=smem, size = 0x4, offset = 0x4, fixed_abs, tag = 'smem constant byte address 0x4 - core index']
  #allocation1 [shape = 'u32[144,128]{1,0:T(1,128)}', space=vmem, size = 0x12000, scoped, tag = 'internal scratch']
  %s0 = inlined_call_operand.vmem [shape: f32[128,16], index: 0, kind: input, shape index: {}]
  %s1 = inlined_call_operand.hbm [shape: f32[512,256], index: 1, kind: input, shape index: {}]
  %s2 = inlined_call_operand.hbm [shape: f32[128,256], index: 2, kind: output, shape index: {}]
  %s3 = sld [smem:[#allocation0]]
  $region45: #{tpu_custom_call.1} parent=0
    _
  %s5 = ssub.s32 1, %s3
  %s6 = scalar_select 0, %s5, %s3
  $region1: #{tpu_custom_call.1} parent=0
    #allocation2 [shape = 'u8[524288]{0}', space=vmem, size = 0x80000, scoped, tag = 'input window, operand 1, single buffered']
    #allocation3 [shape = 's32[2]{0}', space=sflag, size = 0x8, scoped, tag = 'scoped memory for tpu_custom_call.1']
    #allocation4 [shape = 's32[2]{0}', space=sflag, size = 0x8, scoped, tag = 'scoped memory for tpu_custom_call.1']
    #allocation5 [shape = 'u8[32768]{0}', space=vmem, size = 0x8000, scoped, tag = 'output window, operand 0']
    %7 = vsyncpa [#allocation3], 0
    %8 = vsyncpa [#allocation4], 0
    %s9 = scalar_lea.sflag [#allocation4], 1
    %10 = vsyncpa %s9, 0
    loop: start=0, step=1, limit=10
    $region2: #{tpu_custom_call.1} parent=1 // loop_pre_header
      _
    $region3: #{tpu_custom_call.1} parent=1 // loop_header
      %s12 = sphi 0, %s16
      %p13 = scmp.ge.s32.totalorder %s12, 10
      %s22 = sphi 0, %s24
      %s25 = sphi 0, %s22
      %s26 = sphi 0, %s25
      %s42 = sphi 0, %s26
      %s46 = sphi 0, %s46
      %s48 = sphi 0, %s46
      %s49 = sphi 0, %s48
      %s63 = sphi 0, %s49
      %s69 = sphi 0, %s71
      %s72 = sphi 0, %s69
      %s73 = sphi 0, %s72
      %s89 = sphi 0, %s73
    $region4: #{tpu_custom_call.1} parent=1 // loop_header_branch
      %15 = sbr.rel (%p13) target = $region8
    $region5: #{tpu_custom_call.1} parent=1 // loop_body
      %s17 = ssub.s32 %s12, 1
      %s18 = ssub.s32 %s12, 2
      %s19 = sadd.s32 %s12, 1
      %s20 = ssub.s32 %s12, %s19
      %p21 = scmp.eq.s32.totalorder %s20, 0
      %s23 = sadd.s32 %s22, 1
      %s24 = scalar_select %p21, %s22, %s23
      %p27 = pneg %p21
      %p28 = scmp.eq.s32.totalorder %s12, 7
      %p29 = por %p27, %p28
      %p30 = scmp.ne.s32.totalorder %s22, %s25
      %p31 = scmp.eq.s32.totalorder %s12, 0
      %p32 = por %p30, %p31
      %p33 = scmp.ne.s32.totalorder %s22, %s25
      %p34 = scmp.eq.s32.totalorder %s17, 7
      %p35 = por %p33, %p34
      %p36 = scmp.ne.s32.totalorder %s25, %s26
      %p37 = scmp.eq.s32.totalorder %s17, 0
      %p38 = por %p36, %p37
      %p39 = scmp.ne.s32.totalorder %s25, %s26
      %p40 = scmp.eq.s32.totalorder %s18, 7
      %p41 = por %p39, %p40
      %p43 = scmp.ne.s32.totalorder %s26, %s42
      %p44 = scmp.eq.s32.totalorder %s18, 0
      %p45 = por %p43, %p44
      %s47 = sadd.s32 %s46, 1
      %p50 = scmp.eq.s32.totalorder %s12, 7
      %p51 = scmp.ne.s32.totalorder %s46, %s48
      %p52 = scmp.eq.s32.totalorder %s12, 0
      %p53 = por %p51, %p52
      %p54 = scmp.ne.s32.totalorder %s46, %s48
      %p55 = scmp.eq.s32.totalorder %s17, 7
      %p56 = por %p54, %p55
      %p57 = scmp.ne.s32.totalorder %s48, %s49
      %p58 = scmp.eq.s32.totalorder %s17, 0
      %p59 = por %p57, %p58
      %p60 = scmp.ne.s32.totalorder %s48, %s49
      %p61 = scmp.eq.s32.totalorder %s18, 7
      %p62 = por %p60, %p61
      %p64 = scmp.ne.s32.totalorder %s49, %s63
      %p65 = scmp.eq.s32.totalorder %s18, 0
      %p66 = por %p64, %p65
      %s67 = ssub.s32 %s12, %s19
      %p68 = scmp.eq.s32.totalorder %s67, 0
      %s70 = sadd.s32 %s69, 1
      %s71 = scalar_select %p68, %s69, %s70
      %p74 = pneg %p68
      %p75 = scmp.eq.s32.totalorder %s12, 7
      %p76 = por %p74, %p75
      %p77 = scmp.ne.s32.totalorder %s69, %s72
      %p78 = scmp.eq.s32.totalorder %s12, 0
      %p79 = por %p77, %p78
      %p80 = scmp.ne.s32.totalorder %s69, %s72
      %p81 = scmp.eq.s32.totalorder %s17, 7
      %p82 = por %p80, %p81
      %p83 = scmp.ne.s32.totalorder %s72, %s73
      %p84 = scmp.eq.s32.totalorder %s17, 0
      %p85 = por %p83, %p84
      %p86 = scmp.ne.s32.totalorder %s72, %s73
      %p87 = scmp.eq.s32.totalorder %s18, 7
      %p88 = por %p86, %p87
      %p90 = scmp.ne.s32.totalorder %s73, %s89
      %p91 = scmp.eq.s32.totalorder %s18, 0
      %p92 = por %p90, %p91
      %p93 = scmp.le.s32.totalorder 1, %s12
      %p94 = scmp.lt.s32.totalorder %s12, 9
      %p95 = pnand %p93, %p94
      %p96 = pneg %p95
      // Predicated region
      $region9: #{tpu_custom_call.1} parent=5 // pred_check
        _
      $region10: #{tpu_custom_call.1} parent=5 // pred_check_branch
        %98 = sbr.rel (%p95) target = $region12
      $region11: #{tpu_custom_call.1} parent=5 // pred_region
        %s99 = ssub.s32 %s12, 1
        // Predicated region
        $region13: #{tpu_custom_call.1} parent=11 // pred_check
          %p100 = pneg %p59
        $region14: #{tpu_custom_call.1} parent=11 // pred_check_branch
          %102 = sbr.rel (%p100) target = $region16
        $region15: #{tpu_custom_call.1} parent=11 // pred_region
          %s104 = ssub.s32 16384, 16384
          %105 = vsyncadd [#allocation3], %s104
          %s106 = sshll.u32 [#allocation2], 4
          %s107 = int_to_ptr.vmem [resolvable:$true] %s106
          %112 = dma.hbm_to_vmem [thread:$0]  %s1, 16384, %s107, [#allocation3], 256, 256, 16
        $region16: #{tpu_custom_call.1} parent=11 // pred_fallthru
          _
      $region12: #{tpu_custom_call.1} parent=5 // pred_fallthru
        _
      %p113 = scmp.lt.s32.totalorder %s12, 8
      // Predicated region
      $region17: #{tpu_custom_call.1} parent=5 // pred_check
        %p114 = pneg %p113
      $region18: #{tpu_custom_call.1} parent=5 // pred_check_branch
        %116 = sbr.rel (%p114) target = $region20
      $region19: #{tpu_custom_call.1} parent=5 // pred_region
        // Predicated region
        $region21: #{tpu_custom_call.1} parent=19 // pred_check
          %p117 = pneg %p32
        $region22: #{tpu_custom_call.1} parent=19 // pred_check_branch
          %119 = sbr.rel (%p117) target = $region24
        $region23: #{tpu_custom_call.1} parent=19 // pred_region
          %s120 = smul.u32 2, %s12
          %p121 = scmp.lt.s32.totalorder %s120, 15
          %s122 = scalar_select %p121, %s120, 15
          %s123 = smul.addr %s122, 8
          %s124 = scalar_lea.vmem %s0, %s123
          %s125 = smul.u32 2, %s12
        $region24: #{tpu_custom_call.1} parent=19 // pred_fallthru
          _
      $region20: #{tpu_custom_call.1} parent=5 // pred_fallthru
        _
      %p126 = scmp.le.s32.totalorder 1, %s12
      %p127 = scmp.lt.s32.totalorder %s12, 9
      %p128 = pnand %p126, %p127
      %p129 = pneg %p128
      // Predicated region
      $region25: #{tpu_custom_call.1} parent=5 // pred_check
        _
      $region26: #{tpu_custom_call.1} parent=5 // pred_check_branch
        %131 = sbr.rel (%p128) target = $region28
      $region27: #{tpu_custom_call.1} parent=5 // pred_region
        %s132 = ssub.s32 %s12, 1
        // Predicated region
        $region29: #{tpu_custom_call.1} parent=27 // pred_check
          %p133 = pneg %p59
        $region30: #{tpu_custom_call.1} parent=27 // pred_check_branch
          %135 = sbr.rel (%p133) target = $region32
        $region31: #{tpu_custom_call.1} parent=27 // pred_region
          %136 = dma.done [#allocation3], 16384
        $region32: #{tpu_custom_call.1} parent=27 // pred_fallthru
          _
        %s137 = smul.u32 2, %s17
        %p138 = scmp.lt.s32.totalorder %s137, 15
        %s139 = scalar_select %p138, %s137, 15
        %s140 = smul.addr %s139, 8
        %s141 = scalar_lea.vmem %s0, %s140
        %p142 = pneg %p38
        %p143 = pneg %p35
        %p144 = pneg %p59
        %p145 = pneg %p56
        %p146 = pneg %p85
        %p147 = pneg %p82
        %s148 = sand.u32 %s72, 1
        %s149 = scalar_lea.sflag [#allocation4], %s148
        %s150 = sand.u32 %s72, 1
        %s151 = smul.addr %s150, 32
        %s152 = scalar_lea.vmem [#allocation5], %s151
        %s153 = smul.u32 2, %s17
        %p154 = scmp.lt.s32.totalorder %s153, 15
        %s155 = scalar_select %p154, %s153, 15
        %s156 = smul.addr %s155, 8
        %s157 = scalar_lea.vmem %s0, %s156
        %s158 = smul.u32 2, %s17
        %s159 = smul.u32 2, %s17
        %v160 = vlaneseq
        %v161 = vand.u32 %v160, 127
        %v162 = vshra.s32 %v161, 3
        %v163 = vand.u32 %v161, 7
        %vm164 = vcmp.eq.s32.totalorder %v163, 0
        %v165 = vsel %vm164, 3.1415927, 0.0
        %vm166 = vcmp.eq.s32.totalorder %v163, 1
        %v167 = vsel %vm166, 6.2831855, %v165
        %vm168 = vcmp.eq.s32.totalorder %v163, 2
        %v169 = vsel %vm168, 12.566371, %v167
        %vm170 = vcmp.eq.s32.totalorder %v163, 3
        %v171 = vsel %vm170, 25.132742, %v169
        %vm172 = vcmp.eq.s32.totalorder %v163, 4
        %v173 = vsel %vm172, 50.265484, %v171
        %vm174 = vcmp.eq.s32.totalorder %v163, 5
        %v175 = vsel %vm174, 100.53097, %v173
        %vm176 = vcmp.eq.s32.totalorder %v163, 6
        %v177 = vsel %vm176, 201.06194, %v175
        %vm178 = vcmp.eq.s32.totalorder %v163, 7
        %v179 = vsel %vm178, 402.12387, %v177
        %v180 = vld [vmem:[%s157] sm:$0xff]
        %v181 = vld [vmem:[%s157 + $0x8] sm:$0xff]
        %vm182 = vcmp.eq.s32.totalorder %v162, 0
        %v183 = vsel %vm182, 1, 0
        %vm184 = vcmp.eq.s32.totalorder %v183, 1
        %186 = vset.pattern.permute.xlu0 0
        %187 = vperm.xlu0 %186, %v180
        %v188 = vpop.permute.xlu0 %187
        %191 = vset.pattern.permute.xlu0 0
        %192 = vperm.xlu0 %191, %v181
        %v193 = vpop.permute.xlu0 %192
        %v195 = vsel %vm184, %v188, 0.0
        %v196 = vsel %vm184, %v193, 0.0
        %vm197 = vcmp.eq.s32.totalorder %v162, 1
        %v198 = vsel %vm197, 1, 0
        %vm199 = vcmp.eq.s32.totalorder %v198, 1
        %200 = vset.pattern.permute.xlu0 1
        %201 = vperm.xlu0 %200, %v180
        %v202 = vpop.permute.xlu0 %201
        %204 = vset.pattern.permute.xlu0 1
        %205 = vperm.xlu0 %204, %v181
        %v206 = vpop.permute.xlu0 %205
        %v208 = vsel %vm199, %v202, %v195
        %v209 = vsel %vm199, %v206, %v196
        %vm210 = vcmp.eq.s32.totalorder %v162, 2
        %v211 = vsel %vm210, 1, 0
        %vm212 = vcmp.eq.s32.totalorder %v211, 1
        %213 = vset.pattern.permute.xlu0 2
        %214 = vperm.xlu0 %213, %v180
        %v215 = vpop.permute.xlu0 %214
        %217 = vset.pattern.permute.xlu0 2
        %218 = vperm.xlu0 %217, %v181
        %v219 = vpop.permute.xlu0 %218
        %v221 = vsel %vm212, %v215, %v208
        %v222 = vsel %vm212, %v219, %v209
        %vm223 = vcmp.eq.s32.totalorder %v162, 3
        %v224 = vsel %vm223, 1, 0
        %vm225 = vcmp.eq.s32.totalorder %v224, 1
        %226 = vset.pattern.permute.xlu0 3
        %227 = vperm.xlu0 %226, %v180
        %v228 = vpop.permute.xlu0 %227
        %230 = vset.pattern.permute.xlu0 3
        %231 = vperm.xlu0 %230, %v181
        %v232 = vpop.permute.xlu0 %231
        %v234 = vsel %vm225, %v228, %v221
        %v235 = vsel %vm225, %v232, %v222
        %vm236 = vcmp.eq.s32.totalorder %v162, 4
        %v237 = vsel %vm236, 1, 0
        %vm238 = vcmp.eq.s32.totalorder %v237, 1
        %239 = vset.pattern.permute.xlu0 4
        %240 = vperm.xlu0 %239, %v180
        %v241 = vpop.permute.xlu0 %240
        %243 = vset.pattern.permute.xlu0 4
        %244 = vperm.xlu0 %243, %v181
        %v245 = vpop.permute.xlu0 %244
        %v247 = vsel %vm238, %v241, %v234
        %v248 = vsel %vm238, %v245, %v235
        %vm249 = vcmp.eq.s32.totalorder %v162, 5
        %v250 = vsel %vm249, 1, 0
        %vm251 = vcmp.eq.s32.totalorder %v250, 1
        %252 = vset.pattern.permute.xlu0 5
        %253 = vperm.xlu0 %252, %v180
        %v254 = vpop.permute.xlu0 %253
        %256 = vset.pattern.permute.xlu0 5
        %257 = vperm.xlu0 %256, %v181
        %v258 = vpop.permute.xlu0 %257
        %v260 = vsel %vm251, %v254, %v247
        %v261 = vsel %vm251, %v258, %v248
        %vm262 = vcmp.eq.s32.totalorder %v162, 6
        %v263 = vsel %vm262, 1, 0
        %vm264 = vcmp.eq.s32.totalorder %v263, 1
        %265 = vset.pattern.permute.xlu0 6
        %266 = vperm.xlu0 %265, %v180
        %v267 = vpop.permute.xlu0 %266
        %269 = vset.pattern.permute.xlu0 6
        %270 = vperm.xlu0 %269, %v181
        %v271 = vpop.permute.xlu0 %270
        %v273 = vsel %vm264, %v267, %v260
        %v274 = vsel %vm264, %v271, %v261
        %vm275 = vcmp.eq.s32.totalorder %v162, 7
        %v276 = vsel %vm275, 1, 0
        %vm277 = vcmp.eq.s32.totalorder %v276, 1
        %278 = vset.pattern.permute.xlu0 7
        %279 = vperm.xlu0 %278, %v180
        %v280 = vpop.permute.xlu0 %279
        %282 = vset.pattern.permute.xlu0 7
        %283 = vperm.xlu0 %282, %v181
        %v284 = vpop.permute.xlu0 %283
        %v286 = vsel %vm277, %v280, %v273
        %v287 = vsel %vm277, %v284, %v274
        %vm288 = vcmp.eq.s32.totalorder %v162, 8
        %v289 = vsel %vm288, 1, 0
        %vm290 = vcmp.eq.s32.totalorder %v289, 1
        %291 = vset.pattern.permute.xlu0 8
        %292 = vperm.xlu0 %291, %v180
        %v293 = vpop.permute.xlu0 %292
        %295 = vset.pattern.permute.xlu0 8
        %296 = vperm.xlu0 %295, %v181
        %v297 = vpop.permute.xlu0 %296
        %v299 = vsel %vm290, %v293, %v286
        %v300 = vsel %vm290, %v297, %v287
        %vm301 = vcmp.eq.s32.totalorder %v162, 9
        %v302 = vsel %vm301, 1, 0
        %vm303 = vcmp.eq.s32.totalorder %v302, 1
        %304 = vset.pattern.permute.xlu0 9
        %305 = vperm.xlu0 %304, %v180
        %v306 = vpop.permute.xlu0 %305
        %308 = vset.pattern.permute.xlu0 9
        %309 = vperm.xlu0 %308, %v181
        %v310 = vpop.permute.xlu0 %309
        %v312 = vsel %vm303, %v306, %v299
        %v313 = vsel %vm303, %v310, %v300
        %vm314 = vcmp.eq.s32.totalorder %v162, 10
        %v315 = vsel %vm314, 1, 0
        %vm316 = vcmp.eq.s32.totalorder %v315, 1
        %317 = vset.pattern.permute.xlu0 10
        %318 = vperm.xlu0 %317, %v180
        %v319 = vpop.permute.xlu0 %318
        %321 = vset.pattern.permute.xlu0 10
        %322 = vperm.xlu0 %321, %v181
        %v323 = vpop.permute.xlu0 %322
        %v325 = vsel %vm316, %v319, %v312
        %v326 = vsel %vm316, %v323, %v313
        %vm327 = vcmp.eq.s32.totalorder %v162, 11
        %v328 = vsel %vm327, 1, 0
        %vm329 = vcmp.eq.s32.totalorder %v328, 1
        %330 = vset.pattern.permute.xlu0 11
        %331 = vperm.xlu0 %330, %v180
        %v332 = vpop.permute.xlu0 %331
        %334 = vset.pattern.permute.xlu0 11
        %335 = vperm.xlu0 %334, %v181
        %v336 = vpop.permute.xlu0 %335
        %v338 = vsel %vm329, %v332, %v325
        %v339 = vsel %vm329, %v336, %v326
        %vm340 = vcmp.eq.s32.totalorder %v162, 12
        %v341 = vsel %vm340, 1, 0
        %vm342 = vcmp.eq.s32.totalorder %v341, 1
        %343 = vset.pattern.permute.xlu0 12
        %344 = vperm.xlu0 %343, %v180
        %v345 = vpop.permute.xlu0 %344
        %347 = vset.pattern.permute.xlu0 12
        %348 = vperm.xlu0 %347, %v181
        %v349 = vpop.permute.xlu0 %348
        %v351 = vsel %vm342, %v345, %v338
        %v352 = vsel %vm342, %v349, %v339
        %vm353 = vcmp.eq.s32.totalorder %v162, 13
        %v354 = vsel %vm353, 1, 0
        %vm355 = vcmp.eq.s32.totalorder %v354, 1
        %356 = vset.pattern.permute.xlu0 13
        %357 = vperm.xlu0 %356, %v180
        %v358 = vpop.permute.xlu0 %357
        %360 = vset.pattern.permute.xlu0 13
        %361 = vperm.xlu0 %360, %v181
        %v362 = vpop.permute.xlu0 %361
        %v364 = vsel %vm355, %v358, %v351
        %v365 = vsel %vm355, %v362, %v352
        %vm366 = vcmp.eq.s32.totalorder %v162, 14
        %v367 = vsel %vm366, 1, 0
        %vm368 = vcmp.eq.s32.totalorder %v367, 1
        %369 = vset.pattern.permute.xlu0 14
        %370 = vperm.xlu0 %369, %v180
        %v371 = vpop.permute.xlu0 %370
        %373 = vset.pattern.permute.xlu0 14
        %374 = vperm.xlu0 %373, %v181
        %v375 = vpop.permute.xlu0 %374
        %v377 = vsel %vm368, %v371, %v364
        %v378 = vsel %vm368, %v375, %v365
        %vm379 = vcmp.eq.s32.totalorder %v162, 15
        %v380 = vsel %vm379, 1, 0
        %vm381 = vcmp.eq.s32.totalorder %v380, 1
        %382 = vset.pattern.permute.xlu0 15
        %383 = vperm.xlu0 %382, %v180
        %v384 = vpop.permute.xlu0 %383
        %386 = vset.pattern.permute.xlu0 15
        %387 = vperm.xlu0 %386, %v181
        %v388 = vpop.permute.xlu0 %387
        %v390 = vsel %vm381, %v384, %v377
        %v391 = vsel %vm381, %v388, %v378
        %v392 = vmul.f32 %v390, %v179
        %v393 = vmul.f32 %v391, %v179
        %v394 = vand.u32 2147483647, %v392
        %vm395 = vcmp.le.f32.partialorder %v394, 0.7853982
        %vm396 = vcmp.lt.s32.totalorder %v392, 0
        %v397 = vand.u32 %v392, 2139095040
        %v398 = vshrl.u32 %v397, 23
        %v399 = vsub.s32 %v398, 127
        %v400 = vand.u32 2147483647, %v392
        %v401 = vand.u32 %v400, 8388607
        %v402 = vor.u32 %v401, 8388608
        %v403 = vsub.s32 0, %v402
        %v404 = vadd.s32 %v399, 1
        %vm405 = vcmp.gt.s32.totalorder %v404, 0
        %v406 = vsel %vm405, %v404, 0
        %v407 = vshrl.u32 %v406, 5
        %v408 = vand.u32 %v406, 31
        %v409 = vsub.s32 32, %v408
        %v410 = vshrl.u32 683565275, %v409
        %v411 = vshll.u32 683565275, %v408
        %v412 = vshrl.u32 2475754826, %v409
        %v413 = vor.u32 %v411, %v412
        %v414 = vshll.u32 2475754826, %v408
        %v415 = vshrl.u32 2131351028, %v409
        %v416 = vor.u32 %v414, %v415
        %v417 = vshll.u32 2131351028, %v408
        %v418 = vshrl.u32 2102212464, %v409
        %v419 = vor.u32 %v417, %v418
        %v420 = vshll.u32 2102212464, %v408
        %v421 = vshrl.u32 920167782, %v409
        %v422 = vor.u32 %v420, %v421
        %v423 = vshll.u32 920167782, %v408
        %v424 = vshrl.u32 1326507024, %v409
        %v425 = vor.u32 %v423, %v424
        %vm426 = vcmp.lt.s32.totalorder %v407, 1
        %vm427 = vcmp.lt.s32.totalorder %v407, 2
        %vm428 = vcmp.lt.s32.totalorder %v407, 3
        %vm429 = vcmp.lt.s32.totalorder %v407, 4
        %v430 = vsel %vm426, %v410, %v413
        %v431 = vsel %vm429, %v419, 2102212464
        %v432 = vsel %vm428, %v416, %v431
        %v433 = vsel %vm427, %v430, %v432
        %v434 = vsel %vm426, %v413, %v416
        %v435 = vsel %vm429, %v422, 920167782
        %v436 = vsel %vm428, %v419, %v435
        %v437 = vsel %vm427, %v434, %v436
        %v438 = vsel %vm426, %v416, %v419
        %v439 = vsel %vm429, %v425, 1326507024
        %v440 = vsel %vm428, %v422, %v439
        %v441 = vsel %vm427, %v438, %v440
        %v442 = vshll.u32 %v402, 8
        %v443 = vmul.u32.u64.compose %v442, %v441
        %v444 = vextract.low.u32 %v443
        %v445 = vextract.high.u32 %v443
        %v446 = vmul.u32.u64.compose %v442, %v437
        %v447 = vextract.low.u32 %v446
        %v448 = vextract.high.u32 %v446
        %v449 = vmul.u32 %v442, %v433
        %v450 = vadd.s32 %v445, %v447
        %vm451 = vc.u32 %v445, %v447
        %v452 = vadd.s32 %v448, 1
        %v453 = vsel %vm451, %v452, %v448
        %v454 = vadd.s32 %v449, %v453
        %v455 = vadd.s32 %v454, 536870912
        %v456 = vshrl.u32 %v455, 30
        %v457 = vshll.u32 %v456, 30
        %v458 = vsub.s32 %v454, %v457
        %vm459 = vcmp.lt.s32.totalorder %v458, 0
        %v460 = vsub.s32 0, %v458
        %v461 = vsel %vm459, %v460, %v458
        %v462 = vclz %v461
        %v463 = vsub.s32 %v462, 2
        %vm464 = vcmp.gt.s32.totalorder 0, %v463
        %v465 = vsel %vm464, 0, %v463
        %v466 = vsub.s32 32, %v465
        %v467 = vshll.u32 %v458, %v465
        %v468 = vshrl.u32 %v450, %v466
        %v469 = vor.u32 %v467, %v468
        %v470 = vsub.s32 4294967266, %v465
        %v471 = vadd.s32 %v470, 127
        %v472 = vshll.u32 %v471, 23
        %v473 = vor.u32 4788187, %v472
        %v474 = vand.u32 2147483647, %v473
        %v476 = vcvt.s32.f32 %v469
        %v477 = vmul.f32 %v476, %v474
        %v478 = vxor.u32 %v477, 2147483648
        %v479 = vsel %vm396, %v478, %v477
        %v480 = vsub.s32 4, %v456
        %v481 = vsel %vm396, %v480, %v456
        %v482 = vsel %vm395, %v392, %v479
        %v483 = vsel %vm395, 0, %v481
        %v484 = vcosq.f32.pop %v482
        %v485 = vsinq.f32.pop %v482
        %vm486 = vweird.f32 %v392
        %v487 = vand.u32 %v483, 3
        %vm488 = vcmp.lt.s32.totalorder %v487, 2
        %vm489 = vcmp.eq.s32.totalorder %v487, 0
        %v490 = vxor.u32 %v485, 2147483648
        %v491 = vsel %vm489, %v484, %v490
        %vm492 = vcmp.eq.s32.totalorder %v487, 2
        %v493 = vxor.u32 %v484, 2147483648
        %v494 = vsel %vm492, %v493, %v485
        %v495 = vsel %vm488, %v491, %v494
        %v496 = vsel %vm486, nan, %v495
        %v497 = vand.u32 2147483647, %v393
        %vm498 = vcmp.le.f32.partialorder %v497, 0.7853982
        %vm499 = vcmp.lt.s32.totalorder %v393, 0
        %v500 = vand.u32 %v393, 2139095040
        %v501 = vshrl.u32 %v500, 23
        %v502 = vsub.s32 %v501, 127
        %v503 = vand.u32 2147483647, %v393
        %v504 = vand.u32 %v503, 8388607
        %v505 = vor.u32 %v504, 8388608
        %v506 = vsub.s32 0, %v505
        %v507 = vadd.s32 %v502, 1
        %vm508 = vcmp.gt.s32.totalorder %v507, 0
        %v509 = vsel %vm508, %v507, 0
        %v510 = vshrl.u32 %v509, 5
        %v511 = vand.u32 %v509, 31
        %v512 = vsub.s32 32, %v511
        %v513 = vshrl.u32 683565275, %v512
        %v514 = vshll.u32 683565275, %v511
        %v515 = vshrl.u32 2475754826, %v512
        %v516 = vor.u32 %v514, %v515
        %v517 = vshll.u32 2475754826, %v511
        %v518 = vshrl.u32 2131351028, %v512
        %v519 = vor.u32 %v517, %v518
        %v520 = vshll.u32 2131351028, %v511
        %v521 = vshrl.u32 2102212464, %v512
        %v522 = vor.u32 %v520, %v521
        %v523 = vshll.u32 2102212464, %v511
        %v524 = vshrl.u32 920167782, %v512
        %v525 = vor.u32 %v523, %v524
        %v526 = vshll.u32 920167782, %v511
        %v527 = vshrl.u32 1326507024, %v512
        %v528 = vor.u32 %v526, %v527
        %vm529 = vcmp.lt.s32.totalorder %v510, 1
        %vm530 = vcmp.lt.s32.totalorder %v510, 2
        %vm531 = vcmp.lt.s32.totalorder %v510, 3
        %vm532 = vcmp.lt.s32.totalorder %v510, 4
        %v533 = vsel %vm529, %v513, %v516
        %v534 = vsel %vm532, %v522, 2102212464
        %v535 = vsel %vm531, %v519, %v534
        %v536 = vsel %vm530, %v533, %v535
        %v537 = vsel %vm529, %v516, %v519
        %v538 = vsel %vm532, %v525, 920167782
        %v539 = vsel %vm531, %v522, %v538
        %v540 = vsel %vm530, %v537, %v539
        %v541 = vsel %vm529, %v519, %v522
        %v542 = vsel %vm532, %v528, 1326507024
        %v543 = vsel %vm531, %v525, %v542
        %v544 = vsel %vm530, %v541, %v543
        %v545 = vshll.u32 %v505, 8
        %v546 = vmul.u32.u64.compose %v545, %v544
        %v547 = vextract.low.u32 %v546
        %v548 = vextract.high.u32 %v546
        %v549 = vmul.u32.u64.compose %v545, %v540
        %v550 = vextract.low.u32 %v549
        %v551 = vextract.high.u32 %v549
        %v552 = vmul.u32 %v545, %v536
        %v553 = vadd.s32 %v548, %v550
        %vm554 = vc.u32 %v548, %v550
        %v555 = vadd.s32 %v551, 1
        %v556 = vsel %vm554, %v555, %v551
        %v557 = vadd.s32 %v552, %v556
        %v558 = vadd.s32 %v557, 536870912
        %v559 = vshrl.u32 %v558, 30
        %v560 = vshll.u32 %v559, 30
        %v561 = vsub.s32 %v557, %v560
        %vm562 = vcmp.lt.s32.totalorder %v561, 0
        %v563 = vsub.s32 0, %v561
        %v564 = vsel %vm562, %v563, %v561
        %v565 = vclz %v564
        %v566 = vsub.s32 %v565, 2
        %vm567 = vcmp.gt.s32.totalorder 0, %v566
        %v568 = vsel %vm567, 0, %v566
        %v569 = vsub.s32 32, %v568
        %v570 = vshll.u32 %v561, %v568
        %v571 = vshrl.u32 %v553, %v569
        %v572 = vor.u32 %v570, %v571
        %v573 = vsub.s32 4294967266, %v568
        %v574 = vadd.s32 %v573, 127
        %v575 = vshll.u32 %v574, 23
        %v576 = vor.u32 4788187, %v575
        %v577 = vand.u32 2147483647, %v576
        %v579 = vcvt.s32.f32 %v572
        %v580 = vmul.f32 %v579, %v577
        %v581 = vxor.u32 %v580, 2147483648
        %v582 = vsel %vm499, %v581, %v580
        %v583 = vsub.s32 4, %v559
        %v584 = vsel %vm499, %v583, %v559
        %v585 = vsel %vm498, %v393, %v582
        %v586 = vsel %vm498, 0, %v584
        %v587 = vcosq.f32.pop %v585
        %v588 = vsinq.f32.pop %v585
        %vm589 = vweird.f32 %v393
        %v590 = vand.u32 %v586, 3
        %vm591 = vcmp.lt.s32.totalorder %v590, 2
        %vm592 = vcmp.eq.s32.totalorder %v590, 0
        %v593 = vxor.u32 %v588, 2147483648
        %v594 = vsel %vm592, %v587, %v593
        %vm595 = vcmp.eq.s32.totalorder %v590, 2
        %v596 = vxor.u32 %v587, 2147483648
        %v597 = vsel %vm595, %v596, %v588
        %v598 = vsel %vm591, %v594, %v597
        %v599 = vsel %vm589, nan, %v598
        %v600 = vand.u32 2147483647, %v392
        %vm601 = vcmp.le.f32.partialorder %v600, 0.7853982
        %vm602 = vcmp.lt.s32.totalorder %v392, 0
        %v603 = vand.u32 %v392, 2139095040
        %v604 = vshrl.u32 %v603, 23
        %v605 = vsub.s32 %v604, 127
        %v606 = vand.u32 2147483647, %v392
        %v607 = vand.u32 %v606, 8388607
        %v608 = vor.u32 %v607, 8388608
        %v609 = vsub.s32 0, %v608
        %v610 = vadd.s32 %v605, 1
        %vm611 = vcmp.gt.s32.totalorder %v610, 0
        %v612 = vsel %vm611, %v610, 0
        %v613 = vshrl.u32 %v612, 5
        %v614 = vand.u32 %v612, 31
        %v615 = vsub.s32 32, %v614
        %v616 = vshrl.u32 683565275, %v615
        %v617 = vshll.u32 683565275, %v614
        %v618 = vshrl.u32 2475754826, %v615
        %v619 = vor.u32 %v617, %v618
        %v620 = vshll.u32 2475754826, %v614
        %v621 = vshrl.u32 2131351028, %v615
        %v622 = vor.u32 %v620, %v621
        %v623 = vshll.u32 2131351028, %v614
        %v624 = vshrl.u32 2102212464, %v615
        %v625 = vor.u32 %v623, %v624
        %v626 = vshll.u32 2102212464, %v614
        %v627 = vshrl.u32 920167782, %v615
        %v628 = vor.u32 %v626, %v627
        %v629 = vshll.u32 920167782, %v614
        %v630 = vshrl.u32 1326507024, %v615
        %v631 = vor.u32 %v629, %v630
        %vm632 = vcmp.lt.s32.totalorder %v613, 1
        %vm633 = vcmp.lt.s32.totalorder %v613, 2
        %vm634 = vcmp.lt.s32.totalorder %v613, 3
        %vm635 = vcmp.lt.s32.totalorder %v613, 4
        %v636 = vsel %vm632, %v616, %v619
        %v637 = vsel %vm635, %v625, 2102212464
        %v638 = vsel %vm634, %v622, %v637
        %v639 = vsel %vm633, %v636, %v638
        %v640 = vsel %vm632, %v619, %v622
        %v641 = vsel %vm635, %v628, 920167782
        %v642 = vsel %vm634, %v625, %v641
        %v643 = vsel %vm633, %v640, %v642
        %v644 = vsel %vm632, %v622, %v625
        %v645 = vsel %vm635, %v631, 1326507024
        %v646 = vsel %vm634, %v628, %v645
        %v647 = vsel %vm633, %v644, %v646
        %v648 = vshll.u32 %v608, 8
        %v649 = vmul.u32.u64.compose %v648, %v647
        %v650 = vextract.low.u32 %v649
        %v651 = vextract.high.u32 %v649
        %v652 = vmul.u32.u64.compose %v648, %v643
        %v653 = vextract.low.u32 %v652
        %v654 = vextract.high.u32 %v652
        %v655 = vmul.u32 %v648, %v639
        %v656 = vadd.s32 %v651, %v653
        %vm657 = vc.u32 %v651, %v653
        %v658 = vadd.s32 %v654, 1
        %v659 = vsel %vm657, %v658, %v654
        %v660 = vadd.s32 %v655, %v659
        %v661 = vadd.s32 %v660, 536870912
        %v662 = vshrl.u32 %v661, 30
        %v663 = vshll.u32 %v662, 30
        %v664 = vsub.s32 %v660, %v663
        %vm665 = vcmp.lt.s32.totalorder %v664, 0
        %v666 = vsub.s32 0, %v664
        %v667 = vsel %vm665, %v666, %v664
        %v668 = vclz %v667
        %v669 = vsub.s32 %v668, 2
        %vm670 = vcmp.gt.s32.totalorder 0, %v669
        %v671 = vsel %vm670, 0, %v669
        %v672 = vsub.s32 32, %v671
        %v673 = vshll.u32 %v664, %v671
        %v674 = vshrl.u32 %v656, %v672
        %v675 = vor.u32 %v673, %v674
        %v676 = vsub.s32 4294967266, %v671
        %v677 = vadd.s32 %v676, 127
        %v678 = vshll.u32 %v677, 23
        %v679 = vor.u32 4788187, %v678
        %v680 = vand.u32 2147483647, %v679
        %v682 = vcvt.s32.f32 %v675
        %v683 = vmul.f32 %v682, %v680
        %v684 = vxor.u32 %v683, 2147483648
        %v685 = vsel %vm602, %v684, %v683
        %v686 = vsub.s32 4, %v662
        %v687 = vsel %vm602, %v686, %v662
        %v688 = vsel %vm601, %v392, %v685
        %v689 = vsel %vm601, 0, %v687
        %v690 = vcosq.f32.pop %v688
        %v691 = vsinq.f32.pop %v688
        %vm692 = vweird.f32 %v392
        %v693 = vadd.s32 %v689, 3
        %v694 = vand.u32 %v693, 3
        %vm695 = vcmp.lt.s32.totalorder %v694, 2
        %vm696 = vcmp.eq.s32.totalorder %v694, 0
        %v697 = vxor.u32 %v691, 2147483648
        %v698 = vsel %vm696, %v690, %v697
        %vm699 = vcmp.eq.s32.totalorder %v694, 2
        %v700 = vxor.u32 %v690, 2147483648
        %v701 = vsel %vm699, %v700, %v691
        %v702 = vsel %vm695, %v698, %v701
        %v703 = vsel %vm692, nan, %v702
        %v704 = vand.u32 2147483647, %v393
        %vm705 = vcmp.le.f32.partialorder %v704, 0.7853982
        %vm706 = vcmp.lt.s32.totalorder %v393, 0
        %v707 = vand.u32 %v393, 2139095040
        %v708 = vshrl.u32 %v707, 23
        %v709 = vsub.s32 %v708, 127
        %v710 = vand.u32 2147483647, %v393
        %v711 = vand.u32 %v710, 8388607
        %v712 = vor.u32 %v711, 8388608
        %v713 = vsub.s32 0, %v712
        %v714 = vadd.s32 %v709, 1
        %vm715 = vcmp.gt.s32.totalorder %v714, 0
        %v716 = vsel %vm715, %v714, 0
        %v717 = vshrl.u32 %v716, 5
        %v718 = vand.u32 %v716, 31
        %v719 = vsub.s32 32, %v718
        %v720 = vshrl.u32 683565275, %v719
        %v721 = vshll.u32 683565275, %v718
        %v722 = vshrl.u32 2475754826, %v719
        %v723 = vor.u32 %v721, %v722
        %v724 = vshll.u32 2475754826, %v718
        %v725 = vshrl.u32 2131351028, %v719
        %v726 = vor.u32 %v724, %v725
        %v727 = vshll.u32 2131351028, %v718
        %v728 = vshrl.u32 2102212464, %v719
        %v729 = vor.u32 %v727, %v728
        %v730 = vshll.u32 2102212464, %v718
        %v731 = vshrl.u32 920167782, %v719
        %v732 = vor.u32 %v730, %v731
        %v733 = vshll.u32 920167782, %v718
        %v734 = vshrl.u32 1326507024, %v719
        %v735 = vor.u32 %v733, %v734
        %vm736 = vcmp.lt.s32.totalorder %v717, 1
        %vm737 = vcmp.lt.s32.totalorder %v717, 2
        %vm738 = vcmp.lt.s32.totalorder %v717, 3
        %vm739 = vcmp.lt.s32.totalorder %v717, 4
        %v740 = vsel %vm736, %v720, %v723
        %v741 = vsel %vm739, %v729, 2102212464
        %v742 = vsel %vm738, %v726, %v741
        %v743 = vsel %vm737, %v740, %v742
        %v744 = vsel %vm736, %v723, %v726
        %v745 = vsel %vm739, %v732, 920167782
        %v746 = vsel %vm738, %v729, %v745
        %v747 = vsel %vm737, %v744, %v746
        %v748 = vsel %vm736, %v726, %v729
        %v749 = vsel %vm739, %v735, 1326507024
        %v750 = vsel %vm738, %v732, %v749
        %v751 = vsel %vm737, %v748, %v750
        %v752 = vshll.u32 %v712, 8
        %v753 = vmul.u32.u64.compose %v752, %v751
        %v754 = vextract.low.u32 %v753
        %v755 = vextract.high.u32 %v753
        %v756 = vmul.u32.u64.compose %v752, %v747
        %v757 = vextract.low.u32 %v756
        %v758 = vextract.high.u32 %v756
        %v759 = vmul.u32 %v752, %v743
        %v760 = vadd.s32 %v755, %v757
        %vm761 = vc.u32 %v755, %v757
        %v762 = vadd.s32 %v758, 1
        %v763 = vsel %vm761, %v762, %v758
        %v764 = vadd.s32 %v759, %v763
        %v765 = vadd.s32 %v764, 536870912
        %v766 = vshrl.u32 %v765, 30
        %v767 = vshll.u32 %v766, 30
        %v768 = vsub.s32 %v764, %v767
        %vm769 = vcmp.lt.s32.totalorder %v768, 0
        %v770 = vsub.s32 0, %v768
        %v771 = vsel %vm769, %v770, %v768
        %v772 = vclz %v771
        %v773 = vsub.s32 %v772, 2
        %vm774 = vcmp.gt.s32.totalorder 0, %v773
        %v775 = vsel %vm774, 0, %v773
        %v776 = vsub.s32 32, %v775
        %v777 = vshll.u32 %v768, %v775
        %v778 = vshrl.u32 %v760, %v776
        %v779 = vor.u32 %v777, %v778
        %v780 = vsub.s32 4294967266, %v775
        %v781 = vadd.s32 %v780, 127
        %v782 = vshll.u32 %v781, 23
        %v783 = vor.u32 4788187, %v782
        %v784 = vand.u32 2147483647, %v783
        %v786 = vcvt.s32.f32 %v779
        %v787 = vmul.f32 %v786, %v784
        %v788 = vxor.u32 %v787, 2147483648
        %v789 = vsel %vm706, %v788, %v787
        %v790 = vsub.s32 4, %v766
        %v791 = vsel %vm706, %v790, %v766
        %v792 = vsel %vm705, %v393, %v789
        %v793 = vsel %vm705, 0, %v791
        %v794 = vcosq.f32.pop %v792
        %v795 = vsinq.f32.pop %v792
        %vm796 = vweird.f32 %v393
        %v797 = vadd.s32 %v793, 3
        %v798 = vand.u32 %v797, 3
        %vm799 = vcmp.lt.s32.totalorder %v798, 2
        %vm800 = vcmp.eq.s32.totalorder %v798, 0
        %v801 = vxor.u32 %v795, 2147483648
        %v802 = vsel %vm800, %v794, %v801
        %vm803 = vcmp.eq.s32.totalorder %v798, 2
        %v804 = vxor.u32 %v794, 2147483648
        %v805 = vsel %vm803, %v804, %v795
        %v806 = vsel %vm799, %v802, %v805
        %v807 = vsel %vm796, nan, %v806
        %v808 = vpack.c.bf16 %v599, %v496
        %v809 = vunpack.c.l.bf16 %v808
        %v810 = vunpack.c.h.bf16 %v808
        %v811 = vsub.f32 %v496, %v809
        %v812 = vsub.f32 %v599, %v810
        %v813 = vpack.c.bf16 %v807, %v703
        %v814 = vunpack.c.l.bf16 %v813
        %v815 = vunpack.c.h.bf16 %v813
        %v816 = vsub.f32 %v703, %v814
        %v817 = vsub.f32 %v807, %v815
        %v818 = vld [vmem:[#allocation2] sm:$0xff]
        %v819 = vld [vmem:[#allocation2 + $0x8] sm:$0xff]
        %v820 = vld [vmem:[#allocation2 + $0x10] sm:$0xff]
        %v821 = vld [vmem:[#allocation2 + $0x18] sm:$0xff]
        %v822 = vld [vmem:[#allocation2 + $0x20] sm:$0xff]
        %v823 = vld [vmem:[#allocation2 + $0x28] sm:$0xff]
        %v824 = vld [vmem:[#allocation2 + $0x30] sm:$0xff]
        %v825 = vld [vmem:[#allocation2 + $0x38] sm:$0xff]
        %v826 = vld [vmem:[#allocation2 + $0x40] sm:$0xff]
        %v827 = vld [vmem:[#allocation2 + $0x48] sm:$0xff]
        %v828 = vld [vmem:[#allocation2 + $0x50] sm:$0xff]
        %v829 = vld [vmem:[#allocation2 + $0x58] sm:$0xff]
        %v830 = vld [vmem:[#allocation2 + $0x60] sm:$0xff]
        %v831 = vld [vmem:[#allocation2 + $0x68] sm:$0xff]
        %v832 = vld [vmem:[#allocation2 + $0x70] sm:$0xff]
        %v833 = vld [vmem:[#allocation2 + $0x78] sm:$0xff]
        %v834 = vld [vmem:[#allocation2 + $0x80] sm:$0xff]
        %v835 = vld [vmem:[#allocation2 + $0x88] sm:$0xff]
        %v836 = vld [vmem:[#allocation2 + $0x90] sm:$0xff]
        %v837 = vld [vmem:[#allocation2 + $0x98] sm:$0xff]
        %v838 = vld [vmem:[#allocation2 + $0xa0] sm:$0xff]
        %v839 = vld [vmem:[#allocation2 + $0xa8] sm:$0xff]
        %v840 = vld [vmem:[#allocation2 + $0xb0] sm:$0xff]
        %v841 = vld [vmem:[#allocation2 + $0xb8] sm:$0xff]
        %v842 = vld [vmem:[#allocation2 + $0xc0] sm:$0xff]
        %v843 = vld [vmem:[#allocation2 + $0xc8] sm:$0xff]
        %v844 = vld [vmem:[#allocation2 + $0xd0] sm:$0xff]
        %v845 = vld [vmem:[#allocation2 + $0xd8] sm:$0xff]
        %v846 = vld [vmem:[#allocation2 + $0xe0] sm:$0xff]
        %v847 = vld [vmem:[#allocation2 + $0xe8] sm:$0xff]
        %v848 = vld [vmem:[#allocation2 + $0xf0] sm:$0xff]
        %v849 = vld [vmem:[#allocation2 + $0xf8] sm:$0xff]
        %v850 = vld [vmem:[#allocation2 + $0x100] sm:$0xff]
        %v851 = vld [vmem:[#allocation2 + $0x108] sm:$0xff]
        %v852 = vld [vmem:[#allocation2 + $0x110] sm:$0xff]
        %v853 = vld [vmem:[#allocation2 + $0x118] sm:$0xff]
        %v854 = vld [vmem:[#allocation2 + $0x120] sm:$0xff]
        %v855 = vld [vmem:[#allocation2 + $0x128] sm:$0xff]
        %v856 = vld [vmem:[#allocation2 + $0x130] sm:$0xff]
        %v857 = vld [vmem:[#allocation2 + $0x138] sm:$0xff]
        %v858 = vld [vmem:[#allocation2 + $0x140] sm:$0xff]
        %v859 = vld [vmem:[#allocation2 + $0x148] sm:$0xff]
        %v860 = vld [vmem:[#allocation2 + $0x150] sm:$0xff]
        %v861 = vld [vmem:[#allocation2 + $0x158] sm:$0xff]
        %v862 = vld [vmem:[#allocation2 + $0x160] sm:$0xff]
        %v863 = vld [vmem:[#allocation2 + $0x168] sm:$0xff]
        %v864 = vld [vmem:[#allocation2 + $0x170] sm:$0xff]
        %v865 = vld [vmem:[#allocation2 + $0x178] sm:$0xff]
        %v866 = vld [vmem:[#allocation2 + $0x180] sm:$0xff]
        %v867 = vld [vmem:[#allocation2 + $0x188] sm:$0xff]
        %v868 = vld [vmem:[#allocation2 + $0x190] sm:$0xff]
        %v869 = vld [vmem:[#allocation2 + $0x198] sm:$0xff]
        %v870 = vld [vmem:[#allocation2 + $0x1a0] sm:$0xff]
        %v871 = vld [vmem:[#allocation2 + $0x1a8] sm:$0xff]
        %v872 = vld [vmem:[#allocation2 + $0x1b0] sm:$0xff]
        %v873 = vld [vmem:[#allocation2 + $0x1b8] sm:$0xff]
        %v874 = vld [vmem:[#allocation2 + $0x1c0] sm:$0xff]
        %v875 = vld [vmem:[#allocation2 + $0x1c8] sm:$0xff]
        %v876 = vld [vmem:[#allocation2 + $0x1d0] sm:$0xff]
        %v877 = vld [vmem:[#allocation2 + $0x1d8] sm:$0xff]
        %v878 = vld [vmem:[#allocation2 + $0x1e0] sm:$0xff]
        %v879 = vld [vmem:[#allocation2 + $0x1e8] sm:$0xff]
        %v880 = vld [vmem:[#allocation2 + $0x1f0] sm:$0xff]
        %v881 = vld [vmem:[#allocation2 + $0x1f8] sm:$0xff]
        %v882 = vld [vmem:[#allocation2 + $0x200] sm:$0xff]
        %v883 = vld [vmem:[#allocation2 + $0x208] sm:$0xff]
        %v884 = vld [vmem:[#allocation2 + $0x210] sm:$0xff]
        %v885 = vld [vmem:[#allocation2 + $0x218] sm:$0xff]
        %v886 = vld [vmem:[#allocation2 + $0x220] sm:$0xff]
        %v887 = vld [vmem:[#allocation2 + $0x228] sm:$0xff]
        %v888 = vld [vmem:[#allocation2 + $0x230] sm:$0xff]
        %v889 = vld [vmem:[#allocation2 + $0x238] sm:$0xff]
        %v890 = vld [vmem:[#allocation2 + $0x240] sm:$0xff]
        %v891 = vld [vmem:[#allocation2 + $0x248] sm:$0xff]
        %v892 = vld [vmem:[#allocation2 + $0x250] sm:$0xff]
        %v893 = vld [vmem:[#allocation2 + $0x258] sm:$0xff]
        %v894 = vld [vmem:[#allocation2 + $0x260] sm:$0xff]
        %v895 = vld [vmem:[#allocation2 + $0x268] sm:$0xff]
        %v896 = vld [vmem:[#allocation2 + $0x270] sm:$0xff]
        %v897 = vld [vmem:[#allocation2 + $0x278] sm:$0xff]
        %v898 = vld [vmem:[#allocation2 + $0x280] sm:$0xff]
        %v899 = vld [vmem:[#allocation2 + $0x288] sm:$0xff]
        %v900 = vld [vmem:[#allocation2 + $0x290] sm:$0xff]
        %v901 = vld [vmem:[#allocation2 + $0x298] sm:$0xff]
        %v902 = vld [vmem:[#allocation2 + $0x2a0] sm:$0xff]
        %v903 = vld [vmem:[#allocation2 + $0x2a8] sm:$0xff]
        %v904 = vld [vmem:[#allocation2 + $0x2b0] sm:$0xff]
        %v905 = vld [vmem:[#allocation2 + $0x2b8] sm:$0xff]
        %v906 = vld [vmem:[#allocation2 + $0x2c0] sm:$0xff]
        %v907 = vld [vmem:[#allocation2 + $0x2c8] sm:$0xff]
        %v908 = vld [vmem:[#allocation2 + $0x2d0] sm:$0xff]
        %v909 = vld [vmem:[#allocation2 + $0x2d8] sm:$0xff]
        %v910 = vld [vmem:[#allocation2 + $0x2e0] sm:$0xff]
        %v911 = vld [vmem:[#allocation2 + $0x2e8] sm:$0xff]
        %v912 = vld [vmem:[#allocation2 + $0x2f0] sm:$0xff]
        %v913 = vld [vmem:[#allocation2 + $0x2f8] sm:$0xff]
        %v914 = vld [vmem:[#allocation2 + $0x300] sm:$0xff]
        %v915 = vld [vmem:[#allocation2 + $0x308] sm:$0xff]
        %v916 = vld [vmem:[#allocation2 + $0x310] sm:$0xff]
        %v917 = vld [vmem:[#allocation2 + $0x318] sm:$0xff]
        %v918 = vld [vmem:[#allocation2 + $0x320] sm:$0xff]
        %v919 = vld [vmem:[#allocation2 + $0x328] sm:$0xff]
        %v920 = vld [vmem:[#allocation2 + $0x330] sm:$0xff]
        %v921 = vld [vmem:[#allocation2 + $0x338] sm:$0xff]
        %v922 = vld [vmem:[#allocation2 + $0x340] sm:$0xff]
        %v923 = vld [vmem:[#allocation2 + $0x348] sm:$0xff]
        %v924 = vld [vmem:[#allocation2 + $0x350] sm:$0xff]
        %v925 = vld [vmem:[#allocation2 + $0x358] sm:$0xff]
        %v926 = vld [vmem:[#allocation2 + $0x360] sm:$0xff]
        %v927 = vld [vmem:[#allocation2 + $0x368] sm:$0xff]
        %v928 = vld [vmem:[#allocation2 + $0x370] sm:$0xff]
        %v929 = vld [vmem:[#allocation2 + $0x378] sm:$0xff]
        %v930 = vld [vmem:[#allocation2 + $0x380] sm:$0xff]
        %v931 = vld [vmem:[#allocation2 + $0x388] sm:$0xff]
        %v932 = vld [vmem:[#allocation2 + $0x390] sm:$0xff]
        %v933 = vld [vmem:[#allocation2 + $0x398] sm:$0xff]
        %v934 = vld [vmem:[#allocation2 + $0x3a0] sm:$0xff]
        %v935 = vld [vmem:[#allocation2 + $0x3a8] sm:$0xff]
        %v936 = vld [vmem:[#allocation2 + $0x3b0] sm:$0xff]
        %v937 = vld [vmem:[#allocation2 + $0x3b8] sm:$0xff]
        %v938 = vld [vmem:[#allocation2 + $0x3c0] sm:$0xff]
        %v939 = vld [vmem:[#allocation2 + $0x3c8] sm:$0xff]
        %v940 = vld [vmem:[#allocation2 + $0x3d0] sm:$0xff]
        %v941 = vld [vmem:[#allocation2 + $0x3d8] sm:$0xff]
        %v942 = vld [vmem:[#allocation2 + $0x3e0] sm:$0xff]
        %v943 = vld [vmem:[#allocation2 + $0x3e8] sm:$0xff]
        %v944 = vld [vmem:[#allocation2 + $0x3f0] sm:$0xff]
        %v945 = vld [vmem:[#allocation2 + $0x3f8] sm:$0xff]
        %946 = vmatprep.subr.mxu0 %v819
        %947 = vmatpush1.msra.mxu0 %v818
        %948 = vmatprep.subr.mxu0 %v821
        %949 = vmatpush1.msra.mxu0 %v820
        %950 = vmatprep.subr.mxu0 %v823
        %951 = vmatpush1.msra.mxu0 %v822
        %952 = vmatprep.subr.mxu0 %v825
        %953 = vmatpush1.msra.mxu0 %v824
        %954 = vmatprep.subr.mxu0 %v827
        %955 = vmatpush1.msra.mxu0 %v826
        %956 = vmatprep.subr.mxu0 %v829
        %957 = vmatpush1.msra.mxu0 %v828
        %958 = vmatprep.subr.mxu0 %v831
        %959 = vmatpush1.msra.mxu0 %v830
        %960 = vmatprep.subr.mxu0 %v833
        %961 = vmatpush1.msra.mxu0 %v832
        %962 = vmatprep.subr.mxu0 %v835
        %963 = vmatpush1.msra.mxu0 %v834
        %964 = vmatprep.subr.mxu0 %v837
        %965 = vmatpush1.msra.mxu0 %v836
        %966 = vmatprep.subr.mxu0 %v839
        %967 = vmatpush1.msra.mxu0 %v838
        %968 = vmatprep.subr.mxu0 %v841
        %969 = vmatpush1.msra.mxu0 %v840
        %970 = vmatprep.subr.mxu0 %v843
        %971 = vmatpush1.msra.mxu0 %v842
        %972 = vmatprep.subr.mxu0 %v845
        %973 = vmatpush1.msra.mxu0 %v844
        %974 = vmatprep.subr.mxu0 %v847
        %975 = vmatpush1.msra.mxu0 %v846
        %976 = vmatprep.subr.mxu0 %v849
        %977 = vmatpush1.msra.mxu0 %v848
        %978 = vmatprep.subr.mxu0 %v851
        %979 = vmatpush1.msra.mxu0 %v850
        %980 = vmatprep.subr.mxu0 %v853
        %981 = vmatpush1.msra.mxu0 %v852
        %982 = vmatprep.subr.mxu0 %v855
        %983 = vmatpush1.msra.mxu0 %v854
        %984 = vmatprep.subr.mxu0 %v857
        %985 = vmatpush1.msra.mxu0 %v856
        %986 = vmatprep.subr.mxu0 %v859
        %987 = vmatpush1.msra.mxu0 %v858
        %988 = vmatprep.subr.mxu0 %v861
        %989 = vmatpush1.msra.mxu0 %v860
        %990 = vmatprep.subr.mxu0 %v863
        %991 = vmatpush1.msra.mxu0 %v862
        %992 = vmatprep.subr.mxu0 %v865
        %993 = vmatpush1.msra.mxu0 %v864
        %994 = vmatprep.subr.mxu0 %v867
        %995 = vmatpush1.msra.mxu0 %v866
        %996 = vmatprep.subr.mxu0 %v869
        %997 = vmatpush1.msra.mxu0 %v868
        %998 = vmatprep.subr.mxu0 %v871
        %999 = vmatpush1.msra.mxu0 %v870
        %1000 = vmatprep.subr.mxu0 %v873
        %1001 = vmatpush1.msra.mxu0 %v872
        %1002 = vmatprep.subr.mxu0 %v875
        %1003 = vmatpush1.msra.mxu0 %v874
        %1004 = vmatprep.subr.mxu0 %v877
        %1005 = vmatpush1.msra.mxu0 %v876
        %1006 = vmatprep.subr.mxu0 %v879
        %1007 = vmatpush1.msra.mxu0 %v878
        %1008 = vmatprep.subr.mxu0 %v881
        %1009 = vmatpush1.msra.mxu0 %v880
        %1010 = vmatprep.mubr.f32.mxu0 %v814
        %1011 = vmatmul.mubr.f32.gmra.mrb[0].mxu0 %v809
        %v1012 = vpop.f32.mrb[0].mxu0
        %v1013 = vadd.f32 0.0, %v1012
        %v1014 = vpop.f32.mrb[0].mxu0
        %v1015 = vadd.f32 0.0, %v1014
        %1016 = vmatprep.mubr.f32.mxu0 %v815
        %1017 = vmatmul.mubr.f32.gmra.mrb[0].mxu0 %v810
        %v1018 = vpop.f32.mrb[0].mxu0
        %v1019 = vadd.f32 0.0, %v1018
        %v1020 = vpop.f32.mrb[0].mxu0
        %v1021 = vadd.f32 0.0, %v1020
        %1022 = vdwg.mxu0
        %1023 = vmatprep.subr.mxu0 %v883
        %1024 = vmatpush1.msra.mxu0 %v882
        %1025 = vmatprep.subr.mxu0 %v885
        %1026 = vmatpush1.msra.mxu0 %v884
        %1027 = vmatprep.subr.mxu0 %v887
        %1028 = vmatpush1.msra.mxu0 %v886
        %1029 = vmatprep.subr.mxu0 %v889
        %1030 = vmatpush1.msra.mxu0 %v888
        %1031 = vmatprep.subr.mxu0 %v891
        %1032 = vmatpush1.msra.mxu0 %v890
        %1033 = vmatprep.subr.mxu0 %v893
        %1034 = vmatpush1.msra.mxu0 %v892
        %1035 = vmatprep.subr.mxu0 %v895
        %1036 = vmatpush1.msra.mxu0 %v894
        %1037 = vmatprep.subr.mxu0 %v897
        %1038 = vmatpush1.msra.mxu0 %v896
        %1039 = vmatprep.subr.mxu0 %v899
        %1040 = vmatpush1.msra.mxu0 %v898
        %1041 = vmatprep.subr.mxu0 %v901
        %1042 = vmatpush1.msra.mxu0 %v900
        %1043 = vmatprep.subr.mxu0 %v903
        %1044 = vmatpush1.msra.mxu0 %v902
        %1045 = vmatprep.subr.mxu0 %v905
        %1046 = vmatpush1.msra.mxu0 %v904
        %1047 = vmatprep.subr.mxu0 %v907
        %1048 = vmatpush1.msra.mxu0 %v906
        %1049 = vmatprep.subr.mxu0 %v909
        %1050 = vmatpush1.msra.mxu0 %v908
        %1051 = vmatprep.subr.mxu0 %v911
        %1052 = vmatpush1.msra.mxu0 %v910
        %1053 = vmatprep.subr.mxu0 %v913
        %1054 = vmatpush1.msra.mxu0 %v912
        %1055 = vmatprep.subr.mxu0 %v915
        %1056 = vmatpush1.msra.mxu0 %v914
        %1057 = vmatprep.subr.mxu0 %v917
        %1058 = vmatpush1.msra.mxu0 %v916
        %1059 = vmatprep.subr.mxu0 %v919
        %1060 = vmatpush1.msra.mxu0 %v918
        %1061 = vmatprep.subr.mxu0 %v921
        %1062 = vmatpush1.msra.mxu0 %v920
        %1063 = vmatprep.subr.mxu0 %v923
        %1064 = vmatpush1.msra.mxu0 %v922
        %1065 = vmatprep.subr.mxu0 %v925
        %1066 = vmatpush1.msra.mxu0 %v924
        %1067 = vmatprep.subr.mxu0 %v927
        %1068 = vmatpush1.msra.mxu0 %v926
        %1069 = vmatprep.subr.mxu0 %v929
        %1070 = vmatpush1.msra.mxu0 %v928
        %1071 = vmatprep.subr.mxu0 %v931
        %1072 = vmatpush1.msra.mxu0 %v930
        %1073 = vmatprep.subr.mxu0 %v933
        %1074 = vmatpush1.msra.mxu0 %v932
        %1075 = vmatprep.subr.mxu0 %v935
        %1076 = vmatpush1.msra.mxu0 %v934
        %1077 = vmatprep.subr.mxu0 %v937
        %1078 = vmatpush1.msra.mxu0 %v936
        %1079 = vmatprep.subr.mxu0 %v939
        %1080 = vmatpush1.msra.mxu0 %v938
        %1081 = vmatprep.subr.mxu0 %v941
        %1082 = vmatpush1.msra.mxu0 %v940
        %1083 = vmatprep.subr.mxu0 %v943
        %1084 = vmatpush1.msra.mxu0 %v942
        %1085 = vmatprep.subr.mxu0 %v945
        %1086 = vmatpush1.msra.mxu0 %v944
        %1087 = vmatprep.mubr.f32.mxu0 %v816
        %1088 = vmatmul.mubr.f32.gmra.mrb[0].mxu0 %v811
        %v1089 = vpop.f32.mrb[0].mxu0
        %v1090 = vadd.f32 %v1013, %v1089
        %v1091 = vpop.f32.mrb[0].mxu0
        %v1092 = vadd.f32 %v1015, %v1091
        %1093 = vmatprep.mubr.f32.mxu0 %v817
        %1094 = vmatmul.mubr.f32.gmra.mrb[0].mxu0 %v812
        %v1095 = vpop.f32.mrb[0].mxu0
        %v1096 = vadd.f32 %v1019, %v1095
        %v1097 = vpop.f32.mrb[0].mxu0
        %v1098 = vadd.f32 %v1021, %v1097
        %1099 = vdwg.mxu0
        %1100 = vst [vmem:[%s152] sm:$0xff] %v1090
        %1101 = vst [vmem:[%s152 + $0x8] sm:$0xff] %v1092
        %1102 = vst [vmem:[%s152 + $0x10] sm:$0xff] %v1096
        %1103 = vst [vmem:[%s152 + $0x18] sm:$0xff] %v1098
        %s1104 = sand.u32 %s72, 1
        %s1105 = scalar_lea.sflag [#allocation4], %s1104
        %s1106 = sand.u32 %s72, 1
        %s1107 = smul.addr %s1106, 32
        %s1108 = scalar_lea.vmem [#allocation5], %s1107
        // Predicated region
        $region33: #{tpu_custom_call.1} parent=27 // pred_check
          %p1109 = pneg %p82
        $region34: #{tpu_custom_call.1} parent=27 // pred_check_branch
          %1111 = sbr.rel (%p1109) target = $region36
        $region35: #{tpu_custom_call.1} parent=27 // pred_region
          %s1112 = smul.u32 2, %s17
          %s1114 = ssub.s32 512, 512
          %1115 = vsyncadd %s1105, %s1114
          %s1116 = smul.addr %s1112, 2
          %s1117 = smul.addr %s1116, 128
          %s1118 = scalar_lea.hbm %s2, %s1117
          %s1119 = sshll.u32 %s1108, 4
          %s1120 = int_to_ptr.vmem [resolvable:$true] %s1119
          %1125 = dma.vmem_to_hbm [thread:$0]  %s1120, 512, %s1118, %s1105, 256, 256, 16
        $region36: #{tpu_custom_call.1} parent=27 // pred_fallthru
          _
      $region28: #{tpu_custom_call.1} parent=5 // pred_fallthru
        _
      %p1126 = scmp.le.s32.totalorder 2, %s12
      // Predicated region
      $region37: #{tpu_custom_call.1} parent=5 // pred_check
        %p1127 = pneg %p1126
      $region38: #{tpu_custom_call.1} parent=5 // pred_check_branch
        %1129 = sbr.rel (%p1127) target = $region40
      $region39: #{tpu_custom_call.1} parent=5 // pred_region
        %s1130 = ssub.s32 %s12, 2
        // Predicated region
        $region41: #{tpu_custom_call.1} parent=39 // pred_check
          %p1131 = pneg %p88
        $region42: #{tpu_custom_call.1} parent=39 // pred_check_branch
          %1133 = sbr.rel (%p1131) target = $region44
        $region43: #{tpu_custom_call.1} parent=39 // pred_region
          %s1134 = sand.u32 %s73, 1
          %s1135 = scalar_lea.sflag [#allocation4], %s1134
          %s1136 = sand.u32 %s73, 1
          %s1137 = smul.addr %s1136, 32
          %s1138 = scalar_lea.vmem [#allocation5], %s1137
          %1139 = dma.done %s1135, 512
        $region44: #{tpu_custom_call.1} parent=39 // pred_fallthru
          _
      $region40: #{tpu_custom_call.1} parent=5 // pred_fallthru
        _
    $region6: #{tpu_custom_call.1} parent=1 // loop_footer
      %s16 = sadd.s32 1, %s12
    $region7: #{tpu_custom_call.1} parent=1 // loop_footer_branch
      %11 = sbr.rel target = $region3
    $region8: #{tpu_custom_call.1} parent=1 // loop_exit
      _
    %1140 = vsyncpa [#allocation3], 1
    %s1141 = scalar_lea.sflag [#allocation3], 1
    %1142 = vsyncpa %s1141, 1
    %1143 = vsyncpa [#allocation4], 1
    %s1144 = scalar_lea.sflag [#allocation4], 1
    %1145 = vsyncpa %s1144, 1

</llo_original>
